<compile_context>
chip_gen: v6e
topology: v6e:2x2x1
jax: 0.10.0
libtpu: 0.0.40
codegen_flags: <defaults>
</compile_context>

<pallas_src>
import math
import functools

import numpy as np
import jax
import jax.numpy as jnp
from jax.experimental import pallas as pl
from jax.experimental.pallas import tpu as pltpu

D_MODEL = 32
NHEAD = 4
HEAD_DIM = D_MODEL // NHEAD
SEQ = 8
BATCH = 2
LN_EPS = 1e-5


def _encoder_layer_kernel(n_head, src_ref, pos_ref, mask_ref,
                          wqkv_ref, wf_ref, bqkv_ref, pars_ref, out_ref):
    R, E = src_ref.shape          # R = L * n_batch rows, ordered (l, n)
    hd = E // n_head

    src = src_ref[...]                          # (R, E) f32
    qk_in = src + pos_ref[...]                  # q = k = with_pos_embed(src, pos)

    # One fused q/k/v projection: [qk_in ; src] @ [Wq'|Wk|Wv]  (bf16 MXU, f32 acc).
    # 1/sqrt(hd) is already folded into Wq'/bq host-side.
    lhs = jnp.concatenate([qk_in, src], axis=0).astype(jnp.bfloat16)       # (2R, E)
    proj = jnp.dot(lhs, wqkv_ref[...], preferred_element_type=jnp.float32)  # (2R, 3E)
    proj = proj + bqkv_ref[...]

    q = proj[:R, :E]                            # rows from qk_in, cols of Wq'
    k = proj[:R, E:2 * E]                       # rows from qk_in, cols of Wk
    v = proj[R:, 2 * E:]                        # rows from src,   cols of Wv

    # Head-major row stacking: (R, n_head*hd) -> (n_head*R, hd).
    # Static lane slices + sublane concat (robust Mosaic lowering, no reshape).
    def stack_heads(x):
        return jnp.concatenate(
            [x[:, h * hd:(h + 1) * hd] for h in range(n_head)], axis=0)

    qh = stack_heads(q).astype(jnp.bfloat16)    # (T, hd)
    kh = stack_heads(k).astype(jnp.bfloat16)
    vh = stack_heads(v).astype(jnp.bfloat16)

    # One score matmul covering every (batch, head): q @ k^T contracted on hd.
    s = jax.lax.dot_general(qh, kh, (((1,), (1,)), ((), ())),
                            preferred_element_type=jnp.float32)             # (T, T)

    # Host-precomputed additive block-diagonal mask (0 inside same head+batch,
    # -1e30 elsewhere) replaces the old iota/where chain.
    s = s + mask_ref[...]

    # Single f32 softmax for all heads/batches (masked entries exp to exactly 0).
    s = s - jnp.max(s, axis=-1, keepdims=True)
    p = jnp.exp(s)
    o = jnp.dot(p.astype(jnp.bfloat16), vh, preferred_element_type=jnp.float32)
    # Fold 1/sum into the small PV result; approx=True -> EUP reciprocal.
    o = o * pl.reciprocal(jnp.sum(p, axis=-1, keepdims=True), approx=True)
    # TODO(synk): attention-weight dropout is identity in eval mode (not applied).

    # Un-stack heads: row blocks back to lane blocks -> (R, E), head order kept.
    attn = jnp.concatenate([o[h * R:(h + 1) * R, :] for h in range(n_head)], axis=1)

    # Fused MHA out_proj + self.linear (weights/bias fused host-side, exact).
    src2 = jnp.dot(attn.astype(jnp.bfloat16), wf_ref[...],
                   preferred_element_type=jnp.float32) + pars_ref[0:1, :]

    # Residual (dropout identity in eval) + LayerNorm with single-pass stats.
    x = src + src2
    mean = jnp.mean(x, axis=-1, keepdims=True)
    var = jnp.mean(x * x, axis=-1, keepdims=True) - mean * mean
    y = (x - mean) * jax.lax.rsqrt(var + LN_EPS) * pars_ref[1:2, :] + pars_ref[2:3, :]

    # NOTE: a lane-dense (R*E/128, 128) store would avoid masked vst (mostly a
    # v5e concern), but needs a minor-dim relayout; at 2 KiB of output the
    # masked store is not a bottleneck, so keep (R, E).
    out_ref[...] = y.astype(out_ref.dtype)


@functools.lru_cache(maxsize=None)
def _attn_mask(L, N, H):
    """Additive block-diagonal mask over head-major stacked rows (host-side)."""
    R = L * N
    T = H * R
    r = np.arange(T)
    allowed = ((r[:, None] // R) == (r[None, :] // R)) & \
              ((r[:, None] % N) == (r[None, :] % N))
    return np.where(allowed, 0.0, -1e30).astype(np.float32)


def prepare_params(p):
    """Host-side, one-time weight prep: transpose, fold q-scale, fuse Wq|Wk|Wv,
    fuse out_proj∘linear, cast matmul weights to bf16, pack small params."""
    E = D_MODEL
    scale = 1.0 / math.sqrt(HEAD_DIM)
    w_in, b_in = p["in_proj_w"], p["in_proj_b"]                      # (3E,E),(1,3E)
    w_qkv = jnp.concatenate(
        [w_in[:E].T * scale, w_in[E:2 * E].T, w_in[2 * E:].T], axis=1
    ).astype(jnp.bfloat16)                                           # (E, 3E)
    b_qkv = jnp.concatenate([b_in[:, :E] * scale, b_in[:, E:]], axis=1)  # (1, 3E)
    w_f = (p["out_proj_w"].T @ p["lin_w"].T).astype(jnp.bfloat16)    # (E, E)
    b_f = p["out_proj_b"] @ p["lin_w"].T + p["lin_b"]                # (1, E)
    pars = jnp.concatenate([b_f, p["ln_g"], p["ln_b"]], axis=0)      # (3, E)
    return {"w_qkv": w_qkv, "w_f": w_f, "b_qkv": b_qkv, "pars": pars}


@jax.jit
def encoder_layer_thin(src_lne, pos_lne, fp):
    """src_lne, pos_lne: (L, N, E) float32 (PyTorch seq-first convention)."""
    L, N, E = src_lne.shape
    R = L * N
    # Contiguous (free) reshapes -- no transposes anywhere in the wrapper.
    src2d = src_lne.reshape(R, E)
    pos2d = pos_lne.reshape(R, E)
    mask = _attn_mask(L, N, NHEAD)   # static-shape numpy constant (16 KiB)

    vmem = lambda: pl.BlockSpec(memory_space=pltpu.MemorySpace.VMEM)

    out2d = pl.pallas_call(
        functools.partial(_encoder_layer_kernel, NHEAD),
        out_shape=jax.ShapeDtypeStruct((R, E), src_lne.dtype),
        # No grid: whole problem (< 0.1 MiB) is one invocation, no loop machinery.
        in_specs=[vmem() for _ in range(7)],
        out_specs=vmem(),
    )(src2d, pos2d, mask, fp["w_qkv"], fp["w_f"], fp["b_qkv"], fp["pars"])

    return out2d.reshape(L, N, E)


def _reference(src, pos, p):
    """Pure-JAX f32 reference of forward_post (eval mode), unfused."""
    L, N, E = src.shape
    qk = src + pos
    w = p["in_proj_w"]; b = p["in_proj_b"][0]
    q = jnp.einsum("lne,fe->lnf", qk, w[:E]) + b[:E]
    k = jnp.einsum("lne,fe->lnf", qk, w[E:2 * E]) + b[E:2 * E]
    v = jnp.einsum("lne,fe->lnf", src, w[2 * E:]) + b[2 * E:]
    qh = q.reshape(L, N, NHEAD, HEAD_DIM) * (HEAD_DIM ** -0.5)
    kh = k.reshape(L, N, NHEAD, HEAD_DIM)
    vh = v.reshape(L, N, NHEAD, HEAD_DIM)
    s = jnp.einsum("lnhd,mnhd->nhlm", qh, kh)
    a = jax.nn.softmax(s, axis=-1)
    o = jnp.einsum("nhlm,mnhd->lnhd", a, vh).reshape(L, N, E)
    o = o @ p["out_proj_w"].T + p["out_proj_b"][0]
    src2 = o @ p["lin_w"].T + p["lin_b"][0]
    x = src + src2
    mu = x.mean(-1, keepdims=True)
    var = ((x - mu) ** 2).mean(-1, keepdims=True)
    return (x - mu) / jnp.sqrt(var + LN_EPS) * p["ln_g"][0] + p["ln_b"][0]


def make_params(key):
    ks = jax.random.split(key, 8)
    s = 0.1
    return {
        "in_proj_w": jax.random.normal(ks[0], (3 * D_MODEL, D_MODEL), jnp.float32) * s,
        "in_proj_b": jax.random.normal(ks[1], (1, 3 * D_MODEL), jnp.float32) * s,
        "out_proj_w": jax.random.normal(ks[2], (D_MODEL, D_MODEL), jnp.float32) * s,
        "out_proj_b": jax.random.normal(ks[3], (1, D_MODEL), jnp.float32) * s,
        "lin_w": jax.random.normal(ks[4], (D_MODEL, D_MODEL), jnp.float32) * s,
        "lin_b": jax.random.normal(ks[5], (1, D_MODEL), jnp.float32) * s,
        "ln_g": jnp.ones((1, D_MODEL), jnp.float32),
        "ln_b": jnp.zeros((1, D_MODEL), jnp.float32),
    }


if __name__ == "__main__":
    key = jax.random.PRNGKey(0)
    k_src, k_pos, k_par = jax.random.split(key, 3)
    src = jax.random.normal(k_src, (SEQ, BATCH, D_MODEL), jnp.float32)
    pos = jax.random.normal(k_pos, (SEQ, BATCH, D_MODEL), jnp.float32)
    params = make_params(k_par)
    fused = prepare_params(params)      # one-time host-side weight prep

    out = encoder_layer_thin(src, pos, fused)
    out = jax.block_until_ready(out)

    ref = _reference(src, pos, params)
    assert out.shape == (SEQ, BATCH, D_MODEL)
    max_err = float(jnp.max(jnp.abs(out - ref)))
    # Tolerance covers bf16 MXU operands (dominant), the approximate (EUP)
    # softmax reciprocal, and host-fused out_proj∘linear rounding; structural
    # bugs would be O(0.1+).
    assert max_err < 3e-2, f"max abs err {max_err}"
    print("KERNEL_OK")
</pallas_src>

<mosaic_0001>
module attributes {stable_mosaic.version = 11 : i64} {
  func.func @_encoder_layer_kernel(%arg0: memref<16x32xf32, #tpu.memory_space<vmem>>, %arg1: memref<16x32xf32, #tpu.memory_space<vmem>>, %arg2: memref<64x64xf32, #tpu.memory_space<vmem>>, %arg3: memref<32x96xbf16, #tpu.memory_space<vmem>>, %arg4: memref<32x32xbf16, #tpu.memory_space<vmem>>, %arg5: memref<1x96xf32, #tpu.memory_space<vmem>>, %arg6: memref<3x32xf32, #tpu.memory_space<vmem>>, %arg7: memref<16x32xf32, #tpu.memory_space<vmem>>) attributes {dimension_semantics = [], scalar_prefetch = 0 : i64, scratch_operands = 0 : i64, tpu.core_type = #tpu.core_type<tc>} {
    %c0 = arith.constant 0 : index
    %c0_0 = arith.constant 0 : index
    %0 = vector.load %arg0[%c0, %c0_0] : memref<16x32xf32, #tpu.memory_space<vmem>>, vector<16x32xf32>
    %c0_1 = arith.constant 0 : index
    %c0_2 = arith.constant 0 : index
    %1 = vector.load %arg1[%c0_1, %c0_2] : memref<16x32xf32, #tpu.memory_space<vmem>>, vector<16x32xf32>
    %2 = arith.addf %0, %1 : vector<16x32xf32>
    %3 = tpu.concatenate %2, %0 in 0 : vector<16x32xf32>, vector<16x32xf32> -> vector<32x32xf32>
    %4 = arith.truncf %3 : vector<32x32xf32> to vector<32x32xbf16>
    %c0_3 = arith.constant 0 : index
    %c0_4 = arith.constant 0 : index
    %5 = vector.load %arg3[%c0_3, %c0_4] : memref<32x96xbf16, #tpu.memory_space<vmem>>, vector<32x96xbf16>
    %cst = arith.constant dense<0.000000e+00> : vector<32x96xf32>
    %6 = tpu.matmul %4, %5, %cst {dimension_numbers = #tpu.dot_dimension_numbers<[1], [0], [0], [1], [0, 0, 1, 1], [], []>} : vector<32x32xbf16>, vector<32x96xbf16>, vector<32x96xf32> -> vector<32x96xf32>
    %c0_5 = arith.constant 0 : index
    %c0_6 = arith.constant 0 : index
    %7 = vector.load %arg5[%c0_5, %c0_6] : memref<1x96xf32, #tpu.memory_space<vmem>>, vector<1x96xf32>
    %8 = vector.broadcast %7 : vector<1x96xf32> to vector<32x96xf32>
    %9 = arith.addf %6, %8 : vector<32x96xf32>
    %10 = vector.extract_strided_slice %9 {offsets = [0, 0], sizes = [16, 32], strides = [1, 1]} : vector<32x96xf32> to vector<16x32xf32>
    %11 = vector.extract_strided_slice %9 {offsets = [0, 32], sizes = [16, 32], strides = [1, 1]} : vector<32x96xf32> to vector<16x32xf32>
    %12 = vector.extract_strided_slice %9 {offsets = [16, 64], sizes = [16, 32], strides = [1, 1]} : vector<32x96xf32> to vector<16x32xf32>
    %13 = vector.extract_strided_slice %10 {offsets = [0, 0], sizes = [16, 8], strides = [1, 1]} : vector<16x32xf32> to vector<16x8xf32>
    %14 = vector.extract_strided_slice %10 {offsets = [0, 8], sizes = [16, 8], strides = [1, 1]} : vector<16x32xf32> to vector<16x8xf32>
    %15 = vector.extract_strided_slice %10 {offsets = [0, 16], sizes = [16, 8], strides = [1, 1]} : vector<16x32xf32> to vector<16x8xf32>
    %16 = vector.extract_strided_slice %10 {offsets = [0, 24], sizes = [16, 8], strides = [1, 1]} : vector<16x32xf32> to vector<16x8xf32>
    %17 = tpu.concatenate %13, %14, %15, %16 in 0 : vector<16x8xf32>, vector<16x8xf32>, vector<16x8xf32>, vector<16x8xf32> -> vector<64x8xf32>
    %18 = arith.truncf %17 : vector<64x8xf32> to vector<64x8xbf16>
    %19 = vector.extract_strided_slice %11 {offsets = [0, 0], sizes = [16, 8], strides = [1, 1]} : vector<16x32xf32> to vector<16x8xf32>
    %20 = vector.extract_strided_slice %11 {offsets = [0, 8], sizes = [16, 8], strides = [1, 1]} : vector<16x32xf32> to vector<16x8xf32>
    %21 = vector.extract_strided_slice %11 {offsets = [0, 16], sizes = [16, 8], strides = [1, 1]} : vector<16x32xf32> to vector<16x8xf32>
    %22 = vector.extract_strided_slice %11 {offsets = [0, 24], sizes = [16, 8], strides = [1, 1]} : vector<16x32xf32> to vector<16x8xf32>
    %23 = tpu.concatenate %19, %20, %21, %22 in 0 : vector<16x8xf32>, vector<16x8xf32>, vector<16x8xf32>, vector<16x8xf32> -> vector<64x8xf32>
    %24 = arith.truncf %23 : vector<64x8xf32> to vector<64x8xbf16>
    %25 = vector.extract_strided_slice %12 {offsets = [0, 0], sizes = [16, 8], strides = [1, 1]} : vector<16x32xf32> to vector<16x8xf32>
    %26 = vector.extract_strided_slice %12 {offsets = [0, 8], sizes = [16, 8], strides = [1, 1]} : vector<16x32xf32> to vector<16x8xf32>
    %27 = vector.extract_strided_slice %12 {offsets = [0, 16], sizes = [16, 8], strides = [1, 1]} : vector<16x32xf32> to vector<16x8xf32>
    %28 = vector.extract_strided_slice %12 {offsets = [0, 24], sizes = [16, 8], strides = [1, 1]} : vector<16x32xf32> to vector<16x8xf32>
    %29 = tpu.concatenate %25, %26, %27, %28 in 0 : vector<16x8xf32>, vector<16x8xf32>, vector<16x8xf32>, vector<16x8xf32> -> vector<64x8xf32>
    %30 = arith.truncf %29 : vector<64x8xf32> to vector<64x8xbf16>
    %cst_7 = arith.constant dense<0.000000e+00> : vector<64x64xf32>
    %31 = tpu.matmul %18, %24, %cst_7 {dimension_numbers = #tpu.dot_dimension_numbers<[1], [1], [0], [0], [0, 0, 1, 0], [], []>} : vector<64x8xbf16>, vector<64x8xbf16>, vector<64x64xf32> -> vector<64x64xf32>
    %c0_8 = arith.constant 0 : index
    %c0_9 = arith.constant 0 : index
    %32 = vector.load %arg2[%c0_8, %c0_9] : memref<64x64xf32, #tpu.memory_space<vmem>>, vector<64x64xf32>
    %33 = arith.addf %31, %32 : vector<64x64xf32>
    %cst_10 = arith.constant dense<0xFF800000> : vector<64xf32>
    %34 = vector.multi_reduction <maximumf>, %33, %cst_10 [1] : vector<64x64xf32> to vector<64xf32>
    %35 = vector.shape_cast %34 : vector<64xf32> to vector<64x1xf32>
    %36 = vector.broadcast %35 : vector<64x1xf32> to vector<64x64xf32>
    %37 = arith.subf %33, %36 : vector<64x64xf32>
    %38 = math.exp %37 : vector<64x64xf32>
    %39 = arith.truncf %38 : vector<64x64xf32> to vector<64x64xbf16>
    %cst_11 = arith.constant dense<0.000000e+00> : vector<64x8xf32>
    %40 = tpu.matmul %39, %30, %cst_11 {dimension_numbers = #tpu.dot_dimension_numbers<[1], [0], [0], [1], [0, 0, 1, 1], [], []>} : vector<64x64xbf16>, vector<64x8xbf16>, vector<64x8xf32> -> vector<64x8xf32>
    %cst_12 = arith.constant dense<0.000000e+00> : vector<64xf32>
    %41 = vector.multi_reduction <add>, %38, %cst_12 [1] : vector<64x64xf32> to vector<64xf32>
    %42 = vector.shape_cast %41 : vector<64xf32> to vector<64x1xf32>
    %43 = tpu.reciprocal %42 {approx = true} : vector<64x1xf32> -> vector<64x1xf32>
    %44 = vector.broadcast %43 : vector<64x1xf32> to vector<64x8xf32>
    %45 = arith.mulf %40, %44 : vector<64x8xf32>
    %46 = vector.extract_strided_slice %45 {offsets = [0, 0], sizes = [16, 8], strides = [1, 1]} : vector<64x8xf32> to vector<16x8xf32>
    %47 = vector.extract_strided_slice %45 {offsets = [16, 0], sizes = [16, 8], strides = [1, 1]} : vector<64x8xf32> to vector<16x8xf32>
    %48 = vector.extract_strided_slice %45 {offsets = [32, 0], sizes = [16, 8], strides = [1, 1]} : vector<64x8xf32> to vector<16x8xf32>
    %49 = vector.extract_strided_slice %45 {offsets = [48, 0], sizes = [16, 8], strides = [1, 1]} : vector<64x8xf32> to vector<16x8xf32>
    %50 = tpu.concatenate %46, %47, %48, %49 in 1 : vector<16x8xf32>, vector<16x8xf32>, vector<16x8xf32>, vector<16x8xf32> -> vector<16x32xf32>
    %51 = arith.truncf %50 : vector<16x32xf32> to vector<16x32xbf16>
    %c0_13 = arith.constant 0 : index
    %c0_14 = arith.constant 0 : index
    %52 = vector.load %arg4[%c0_13, %c0_14] : memref<32x32xbf16, #tpu.memory_space<vmem>>, vector<32x32xbf16>
    %cst_15 = arith.constant dense<0.000000e+00> : vector<16x32xf32>
    %53 = tpu.matmul %51, %52, %cst_15 {dimension_numbers = #tpu.dot_dimension_numbers<[1], [0], [0], [1], [0, 0, 1, 1], [], []>} : vector<16x32xbf16>, vector<32x32xbf16>, vector<16x32xf32> -> vector<16x32xf32>
    %c0_16 = arith.constant 0 : index
    %c0_17 = arith.constant 0 : index
    %54 = vector.load %arg6[%c0_16, %c0_17] : memref<3x32xf32, #tpu.memory_space<vmem>>, vector<1x32xf32>
    %55 = vector.broadcast %54 : vector<1x32xf32> to vector<16x32xf32>
    %56 = arith.addf %53, %55 : vector<16x32xf32>
    %57 = arith.addf %0, %56 : vector<16x32xf32>
    %cst_18 = arith.constant dense<0.000000e+00> : vector<16xf32>
    %58 = vector.multi_reduction <add>, %57, %cst_18 [1] : vector<16x32xf32> to vector<16xf32>
    %59 = vector.shape_cast %58 : vector<16xf32> to vector<16x1xf32>
    %cst_19 = arith.constant 3.200000e+01 : f32
    %60 = vector.broadcast %cst_19 : f32 to vector<16x1xf32>
    %61 = arith.divf %59, %60 : vector<16x1xf32>
    %62 = arith.mulf %57, %57 : vector<16x32xf32>
    %cst_20 = arith.constant dense<0.000000e+00> : vector<16xf32>
    %63 = vector.multi_reduction <add>, %62, %cst_20 [1] : vector<16x32xf32> to vector<16xf32>
    %64 = vector.shape_cast %63 : vector<16xf32> to vector<16x1xf32>
    %cst_21 = arith.constant 3.200000e+01 : f32
    %65 = vector.broadcast %cst_21 : f32 to vector<16x1xf32>
    %66 = arith.divf %64, %65 : vector<16x1xf32>
    %67 = arith.mulf %61, %61 : vector<16x1xf32>
    %68 = arith.subf %66, %67 : vector<16x1xf32>
    %69 = vector.broadcast %61 : vector<16x1xf32> to vector<16x32xf32>
    %70 = arith.subf %57, %69 : vector<16x32xf32>
    %cst_22 = arith.constant 9.99999974E-6 : f32
    %71 = vector.broadcast %cst_22 : f32 to vector<16x1xf32>
    %72 = arith.addf %68, %71 : vector<16x1xf32>
    %73 = math.rsqrt %72 : vector<16x1xf32>
    %74 = vector.broadcast %73 : vector<16x1xf32> to vector<16x32xf32>
    %75 = arith.mulf %70, %74 : vector<16x32xf32>
    %c1 = arith.constant 1 : index
    %c0_23 = arith.constant 0 : index
    %76 = vector.load %arg6[%c1, %c0_23] : memref<3x32xf32, #tpu.memory_space<vmem>>, vector<1x32xf32>
    %77 = vector.broadcast %76 : vector<1x32xf32> to vector<16x32xf32>
    %78 = arith.mulf %75, %77 : vector<16x32xf32>
    %c2 = arith.constant 2 : index
    %c0_24 = arith.constant 0 : index
    %79 = vector.load %arg6[%c2, %c0_24] : memref<3x32xf32, #tpu.memory_space<vmem>>, vector<1x32xf32>
    %80 = vector.broadcast %79 : vector<1x32xf32> to vector<16x32xf32>
    %81 = arith.addf %78, %80 : vector<16x32xf32>
    %c0_25 = arith.constant 0 : index
    %c0_26 = arith.constant 0 : index
    %82 = vector.load %arg7[%c0_25, %c0_26] : memref<16x32xf32, #tpu.memory_space<vmem>>, vector<16x32xf32>
    tpu.vector_store %arg7[%c0_25, %c0_26], %81 {strides = array<i32>} : memref<16x32xf32, #tpu.memory_space<vmem>>, vector<16x32xf32>,
    return
  }
}

</mosaic_0001>

<llo_original>
// kernel: encoder_layer_thin.1
$region0: #{encoder_layer_thin.1}
  #allocation0 [shape = 'u32[]', space=smem, size = 0x4, offset = 0x4, fixed_abs, tag = 'smem constant byte address 0x4 - core index']
  #allocation1 [shape = 'u32[144,128]{1,0:T(1,128)}', space=vmem, size = 0x12000, scoped, tag = 'internal scratch']
  %s0 = inlined_call_operand.hbm [shape: f32[16,32], index: 0, kind: input, shape index: {}]
  %s1 = inlined_call_operand.hbm [shape: f32[16,32], index: 1, kind: input, shape index: {}]
  %s2 = inlined_call_operand.hbm [shape: f32[64,64], index: 2, kind: input, shape index: {}]
  %s3 = inlined_call_operand.hbm [shape: bf16[32,96], index: 3, kind: input, shape index: {}]
  %s4 = inlined_call_operand.hbm [shape: bf16[32,32], index: 4, kind: input, shape index: {}]
  %s5 = inlined_call_operand.vmem [shape: f32[1,96], index: 5, kind: input, shape index: {}]
  %s6 = inlined_call_operand.vmem [shape: f32[3,32], index: 6, kind: input, shape index: {}]
  %s7 = inlined_call_operand.hbm [shape: f32[16,32], index: 7, kind: output, shape index: {}]
  %s8 = sld [smem:[#allocation0]]
  $region58: #{encoder_layer_thin.1} parent=0
    _
  %s10 = ssub.s32 1, %s8
  %s11 = scalar_select 0, %s10, %s8
  $region1: #{encoder_layer_thin.1} parent=0
    #allocation2 [shape = 'u8[8192]{0}', space=vmem, size = 0x2000, scoped, tag = 'input window, operand 0, single buffered']
    #allocation3 [shape = 's32[1]{0}', space=sflag, size = 0x4, scoped, tag = 'scoped memory for encoder_layer_thin.1']
    #allocation4 [shape = 's32[1]{0}', space=sflag, size = 0x4, scoped, tag = 'scoped memory for encoder_layer_thin.1']
    #allocation5 [shape = 'u8[8192]{0}', space=vmem, size = 0x2000, scoped, tag = 'input window, operand 1, single buffered']
    #allocation6 [shape = 's32[1]{0}', space=sflag, size = 0x4, scoped, tag = 'scoped memory for encoder_layer_thin.1']
    #allocation7 [shape = 'u8[32768]{0}', space=vmem, size = 0x8000, scoped, tag = 'input window, operand 2, single buffered']
    #allocation8 [shape = 'u8[8192]{0}', space=vmem, size = 0x2000, scoped, tag = 'input window, operand 3, single buffered']
    #allocation9 [shape = 's32[1]{0}', space=sflag, size = 0x4, scoped, tag = 'scoped memory for encoder_layer_thin.1']
    #allocation10 [shape = 'u8[8192]{0}', space=vmem, size = 0x2000, scoped, tag = 'input window, operand 4, single buffered']
    #allocation11 [shape = 'u8[8192]{0}', space=vmem, size = 0x2000, scoped, tag = 'output window, operand 0, single buffered']
    %12 = vsyncpa [#allocation3], 0
    %13 = vsyncpa [#allocation6], 0
    %14 = vsyncpa [#allocation9], 0
    %15 = vsyncpa [#allocation4], 0
    // Predicated region
    $region2: #{encoder_layer_thin.1} parent=1 // pred_check
      _
    $region3: #{encoder_layer_thin.1} parent=1 // pred_check_branch
      %17 = sbr.rel (0) target = $region5
    $region4: #{encoder_layer_thin.1} parent=1 // pred_region
      %s19 = ssub.s32 256, 256
      %20 = vsyncadd [#allocation3], %s19
      %s21 = sshll.u32 [#allocation2], 4
      %s22 = int_to_ptr.vmem [resolvable:$true] %s21
      %27 = dma.hbm_to_vmem [thread:$0]  %s0, 256, %s22, [#allocation3], 128, 128, 8
    $region5: #{encoder_layer_thin.1} parent=1 // pred_fallthru
      _
    // Predicated region
    $region6: #{encoder_layer_thin.1} parent=1 // pred_check
      _
    $region7: #{encoder_layer_thin.1} parent=1 // pred_check_branch
      %29 = sbr.rel (0) target = $region9
    $region8: #{encoder_layer_thin.1} parent=1 // pred_region
      %s31 = ssub.s32 256, 256
      %32 = vsyncadd [#allocation6], %s31
      %s33 = sshll.u32 [#allocation5], 4
      %s34 = int_to_ptr.vmem [resolvable:$true] %s33
      %39 = dma.hbm_to_vmem [thread:$0]  %s1, 256, %s34, [#allocation6], 128, 128, 8
    $region9: #{encoder_layer_thin.1} parent=1 // pred_fallthru
      _
    // Predicated region
    $region10: #{encoder_layer_thin.1} parent=1 // pred_check
      _
    $region11: #{encoder_layer_thin.1} parent=1 // pred_check_branch
      %41 = sbr.rel (0) target = $region13
    $region12: #{encoder_layer_thin.1} parent=1 // pred_region
      %s43 = ssub.s32 1024, 1024
      %44 = vsyncadd [#allocation6], %s43
      %s45 = sshll.u32 [#allocation7], 4
      %s46 = int_to_ptr.vmem [resolvable:$true] %s45
      %51 = dma.hbm_to_vmem [thread:$0]  %s2, 1024, %s46, [#allocation6], 128, 128, 8
    $region13: #{encoder_layer_thin.1} parent=1 // pred_fallthru
      _
    // Predicated region
    $region14: #{encoder_layer_thin.1} parent=1 // pred_check
      _
    $region15: #{encoder_layer_thin.1} parent=1 // pred_check_branch
      %53 = sbr.rel (0) target = $region17
    $region16: #{encoder_layer_thin.1} parent=1 // pred_region
      %s55 = ssub.s32 256, 256
      %56 = vsyncadd [#allocation9], %s55
      %s57 = sshll.u32 [#allocation8], 4
      %s58 = int_to_ptr.vmem [resolvable:$true] %s57
      %63 = dma.hbm_to_vmem [thread:$0]  %s3, 256, %s58, [#allocation9], 64, 64, 4
    $region17: #{encoder_layer_thin.1} parent=1 // pred_fallthru
      _
    // Predicated region
    $region18: #{encoder_layer_thin.1} parent=1 // pred_check
      _
    $region19: #{encoder_layer_thin.1} parent=1 // pred_check_branch
      %65 = sbr.rel (0) target = $region21
    $region20: #{encoder_layer_thin.1} parent=1 // pred_region
      %s67 = ssub.s32 256, 256
      %68 = vsyncadd [#allocation9], %s67
      %s69 = sshll.u32 [#allocation10], 4
      %s70 = int_to_ptr.vmem [resolvable:$true] %s69
      %75 = dma.hbm_to_vmem [thread:$0]  %s4, 256, %s70, [#allocation9], 64, 64, 4
    $region21: #{encoder_layer_thin.1} parent=1 // pred_fallthru
      _
    // Predicated region
    $region22: #{encoder_layer_thin.1} parent=1 // pred_check
      _
    $region23: #{encoder_layer_thin.1} parent=1 // pred_check_branch
      %77 = sbr.rel (0) target = $region25
    $region24: #{encoder_layer_thin.1} parent=1 // pred_region
      _
    $region25: #{encoder_layer_thin.1} parent=1 // pred_fallthru
      _
    // Predicated region
    $region26: #{encoder_layer_thin.1} parent=1 // pred_check
      _
    $region27: #{encoder_layer_thin.1} parent=1 // pred_check_branch
      %79 = sbr.rel (0) target = $region29
    $region28: #{encoder_layer_thin.1} parent=1 // pred_region
      _
    $region29: #{encoder_layer_thin.1} parent=1 // pred_fallthru
      _
    // Predicated region
    $region30: #{encoder_layer_thin.1} parent=1 // pred_check
      _
    $region31: #{encoder_layer_thin.1} parent=1 // pred_check_branch
      %81 = sbr.rel (0) target = $region33
    $region32: #{encoder_layer_thin.1} parent=1 // pred_region
      %82 = dma.done [#allocation3], 256
    $region33: #{encoder_layer_thin.1} parent=1 // pred_fallthru
      _
    // Predicated region
    $region34: #{encoder_layer_thin.1} parent=1 // pred_check
      _
    $region35: #{encoder_layer_thin.1} parent=1 // pred_check_branch
      %84 = sbr.rel (0) target = $region37
    $region36: #{encoder_layer_thin.1} parent=1 // pred_region
      %85 = dma.done [#allocation6], 256
    $region37: #{encoder_layer_thin.1} parent=1 // pred_fallthru
      _
    // Predicated region
    $region38: #{encoder_layer_thin.1} parent=1 // pred_check
      _
    $region39: #{encoder_layer_thin.1} parent=1 // pred_check_branch
      %87 = sbr.rel (0) target = $region41
    $region40: #{encoder_layer_thin.1} parent=1 // pred_region
      %88 = dma.done [#allocation6], 1024
    $region41: #{encoder_layer_thin.1} parent=1 // pred_fallthru
      _
    // Predicated region
    $region42: #{encoder_layer_thin.1} parent=1 // pred_check
      _
    $region43: #{encoder_layer_thin.1} parent=1 // pred_check_branch
      %90 = sbr.rel (0) target = $region45
    $region44: #{encoder_layer_thin.1} parent=1 // pred_region
      %91 = dma.done [#allocation9], 256
    $region45: #{encoder_layer_thin.1} parent=1 // pred_fallthru
      _
    // Predicated region
    $region46: #{encoder_layer_thin.1} parent=1 // pred_check
      _
    $region47: #{encoder_layer_thin.1} parent=1 // pred_check_branch
      %93 = sbr.rel (0) target = $region49
    $region48: #{encoder_layer_thin.1} parent=1 // pred_region
      %94 = dma.done [#allocation9], 256
    $region49: #{encoder_layer_thin.1} parent=1 // pred_fallthru
      _
    %v96 = vld [vmem:[#allocation2] sm:$0xff]
    %v97 = vld [vmem:[#allocation2 + $0x8] sm:$0xff]
    %v98 = vld [vmem:[#allocation5] sm:$0xff]
    %v99 = vld [vmem:[#allocation5 + $0x8] sm:$0xff]
    %v100 = vadd.f32 %v96, %v98
    %v101 = vadd.f32 %v97, %v99
    %v102 = vpack.c.bf16 %v101, %v100
    %v103 = vpack.c.bf16 %v97, %v96
    %v104 = vld [vmem:[#allocation8] sm:$0xf]
    %v105 = vld [vmem:[#allocation8 + $0x4] sm:$0xf]
    %v106 = vld [vmem:[#allocation8 + $0x8] sm:$0xf]
    %v107 = vld [vmem:[#allocation8 + $0xc] sm:$0xf]
    %v108 = vld [vmem:[%s5] sm:$0x1]
    %v110 = vlaneseq
    %v111 = vshrl.u32 %v110, 7
    %v112 = vsub.s32 0, %v111
    %v113 = vrot.slane %v108, %v112
    %v119 = vunpack.c.l.b16 %v104
    %v120 = vunpack.c.l.b16 %v105
    %v121 = vunpack.c.l.b16 %v106
    %v122 = vunpack.c.l.b16 %v107
    %v123 = vpack.c.b16 %v120, %v119
    %v124 = vpack.c.b16 %v122, %v121
    %vm127 = vcmask 261120
    %v129 = vsel %vm127, %v102, 0
    %v132 = vsel %vm127, %v103, 0
    %134 = vmatprep.subr.bf16.mxu0 0
    %135 = vmatpush1.bf16.msra.mxu0 0
    %136 = vmatprep.subr.bf16.mxu0 0
    %137 = vmatpush1.bf16.msra.mxu0 0
    %138 = vmatprep.subr.bf16.mxu0 0
    %139 = vmatpush1.bf16.msra.mxu0 0
    %140 = vmatprep.subr.bf16.mxu0 0
    %141 = vmatpush1.bf16.msra.mxu0 0
    %142 = vmatprep.subr.bf16.mxu0 0
    %143 = vmatpush1.bf16.msra.mxu0 0
    %144 = vmatprep.subr.bf16.mxu0 0
    %145 = vmatpush1.bf16.msra.mxu0 0
    %146 = vmatprep.subr.bf16.mxu0 0
    %147 = vmatpush1.bf16.msra.mxu0 %v124
    %148 = vmatprep.subr.bf16.mxu0 0
    %149 = vmatpush1.bf16.msra.mxu0 %v123
    %150 = vmatprep.subr.bf16.mxu0 0
    %151 = vmatpush2.bf16.msra.mxu0 0
    %152 = vmatprep.subr.bf16.mxu0 0
    %153 = vmatpush2.bf16.msra.mxu0 0
    %154 = vmatprep.subr.bf16.mxu0 0
    %155 = vmatpush2.bf16.msra.mxu0 0
    %156 = vmatprep.subr.bf16.mxu0 0
    %157 = vmatpush2.bf16.msra.mxu0 0
    %158 = vmatprep.subr.bf16.mxu0 0
    %159 = vmatpush2.bf16.msra.mxu0 0
    %160 = vmatprep.subr.bf16.mxu0 0
    %161 = vmatpush2.bf16.msra.mxu0 0
    %162 = vmatprep.subr.bf16.mxu0 0
    %163 = vmatpush2.bf16.msra.mxu0 0
    %164 = vmatprep.subr.bf16.mxu0 0
    %165 = vmatpush2.bf16.msra.mxu0 0
    %166 = vmatprep.mubr.bf16.mxu0 0
    %167 = vmatmul.mubr.bf16.gmra.mxu0 %v129
    %v168 = vpop.f32.mrf.mxu0
    %v169 = vadd.f32 %v113, %v168
    %v170 = vpop.f32.mrf.mxu0
    %v171 = vpop.f32.mrf.mxu0
    %v172 = vadd.f32 %v113, %v171
    %v173 = vpop.f32.mrf.mxu0
    %174 = vmatprep.mubr.bf16.mxu0 0
    %175 = vmatmul.mubr.bf16.gmra.mxu0 %v132
    %v176 = vpop.f32.mrf.mxu0
    %v177 = vadd.f32 %v113, %v176
    %v178 = vpop.f32.mrf.mxu0
    %v179 = vpop.f32.mrf.mxu0
    %v180 = vadd.f32 %v113, %v179
    %v181 = vpop.f32.mrf.mxu0
    %182 = vdwg.mxu0
    %185 = vrot.lane.b32.xlu0 %v169, 120
    %v186 = vpop.permute.xlu0 %185
    %187 = vrot.lane.b32.xlu0 %v172, 120
    %v188 = vpop.permute.xlu0 %187
    %191 = vrot.lane.b32.xlu0 %v169, 112
    %v192 = vpop.permute.xlu0 %191
    %193 = vrot.lane.b32.xlu0 %v172, 112
    %v194 = vpop.permute.xlu0 %193
    %197 = vrot.lane.b32.xlu0 %v169, 104
    %v198 = vpop.permute.xlu0 %197
    %199 = vrot.lane.b32.xlu0 %v172, 104
    %v200 = vpop.permute.xlu0 %199
    %v203 = vpack.c.bf16 %v172, %v169
    %v204 = vpack.c.bf16 %v188, %v186
    %v205 = vpack.c.bf16 %v194, %v192
    %v206 = vpack.c.bf16 %v200, %v198
    %209 = vrot.lane.b32.xlu0 %v177, 120
    %v210 = vpop.permute.xlu0 %209
    %211 = vrot.lane.b32.xlu0 %v180, 120
    %v212 = vpop.permute.xlu0 %211
    %215 = vrot.lane.b32.xlu0 %v177, 112
    %v216 = vpop.permute.xlu0 %215
    %217 = vrot.lane.b32.xlu0 %v180, 112
    %v218 = vpop.permute.xlu0 %217
    %221 = vrot.lane.b32.xlu0 %v177, 104
    %v222 = vpop.permute.xlu0 %221
    %223 = vrot.lane.b32.xlu0 %v180, 104
    %v224 = vpop.permute.xlu0 %223
    %v227 = vpack.c.bf16 %v180, %v177
    %v228 = vpack.c.bf16 %v212, %v210
    %v229 = vpack.c.bf16 %v218, %v216
    %v230 = vpack.c.bf16 %v224, %v222
    %v231 = vld [vmem:[#allocation7] sm:$0xff]
    %v232 = vld [vmem:[#allocation7 + $0x8] sm:$0xff]
    %v233 = vld [vmem:[#allocation7 + $0x10] sm:$0xff]
    %v234 = vld [vmem:[#allocation7 + $0x18] sm:$0xff]
    %v235 = vld [vmem:[#allocation7 + $0x20] sm:$0xff]
    %v236 = vld [vmem:[#allocation7 + $0x28] sm:$0xff]
    %v237 = vld [vmem:[#allocation7 + $0x30] sm:$0xff]
    %v238 = vld [vmem:[#allocation7 + $0x38] sm:$0xff]
    %243 = vrot.lane.b32.xlu0 %v203, 96
    %v244 = vpop.permute.xlu0 %243
    %245 = vrot.lane.b32.xlu0 %v204, 96
    %v246 = vpop.permute.xlu0 %245
    %247 = vrot.lane.b32.xlu0 %v205, 96
    %v248 = vpop.permute.xlu0 %247
    %249 = vrot.lane.b32.xlu0 %v206, 96
    %v250 = vpop.permute.xlu0 %249
    %vm251 = vcmask 64512
    %v253 = vsel %vm251, %v203, 0
    %v256 = vsel %vm251, %v204, 0
    %v259 = vsel %vm251, %v205, 0
    %v262 = vsel %vm251, %v206, 0
    %v265 = vsel %vm251, %v244, 0
    %v268 = vsel %vm251, %v246, 0
    %v271 = vsel %vm251, %v248, 0
    %v274 = vsel %vm251, %v250, 0
    %276 = vmatprep.subr.bf16.mxu0 0
    %277 = vmatpush1.bf16.xpose.msra.mxu0 0
    %278 = vmatprep.subr.bf16.mxu0 0
    %279 = vmatpush1.bf16.xpose.msra.mxu0 0
    %280 = vmatprep.subr.bf16.mxu0 0
    %281 = vmatpush1.bf16.xpose.msra.mxu0 0
    %282 = vmatprep.subr.bf16.mxu0 0
    %283 = vmatpush1.bf16.xpose.msra.mxu0 0
    %284 = vmatprep.subr.bf16.mxu0 0
    %285 = vmatpush1.bf16.xpose.msra.mxu0 %v274
    %286 = vmatprep.subr.bf16.mxu0 0
    %287 = vmatpush1.bf16.xpose.msra.mxu0 %v271
    %288 = vmatprep.subr.bf16.mxu0 0
    %289 = vmatpush1.bf16.xpose.msra.mxu0 %v268
    %290 = vmatprep.subr.bf16.mxu0 0
    %291 = vmatpush1.bf16.xpose.msra.mxu0 %v265
    %292 = vmatprep.subr.bf16.mxu0 0
    %293 = vmatpush2.bf16.xpose.msra.mxu0 0
    %294 = vmatprep.subr.bf16.mxu0 0
    %295 = vmatpush2.bf16.xpose.msra.mxu0 0
    %296 = vmatprep.subr.bf16.mxu0 0
    %297 = vmatpush2.bf16.xpose.msra.mxu0 0
    %298 = vmatprep.subr.bf16.mxu0 0
    %299 = vmatpush2.bf16.xpose.msra.mxu0 0
    %300 = vmatprep.subr.bf16.mxu0 0
    %301 = vmatpush2.bf16.xpose.msra.mxu0 0
    %302 = vmatprep.subr.bf16.mxu0 0
    %303 = vmatpush2.bf16.xpose.msra.mxu0 0
    %304 = vmatprep.subr.bf16.mxu0 0
    %305 = vmatpush2.bf16.xpose.msra.mxu0 0
    %306 = vmatprep.subr.bf16.mxu0 0
    %307 = vmatpush2.bf16.xpose.msra.mxu0 0
    %308 = vmatprep.mubr.bf16.mxu0 0
    %309 = vmatmul.mubr.bf16.gmra.mxu0 %v253
    %v310 = vpop.f32.mrf.mxu0
    %v311 = vadd.f32 %v231, %v310
    %v312 = vpop.f32.mrf.mxu0
    %v313 = vpop.f32.mrf.mxu0
    %v314 = vadd.f32 %v232, %v313
    %v315 = vpop.f32.mrf.mxu0
    %316 = vmatprep.mubr.bf16.mxu0 0
    %317 = vmatmul.mubr.bf16.gmra.mxu0 %v256
    %v318 = vpop.f32.mrf.mxu0
    %v319 = vadd.f32 %v233, %v318
    %v320 = vpop.f32.mrf.mxu0
    %v321 = vpop.f32.mrf.mxu0
    %v322 = vadd.f32 %v234, %v321
    %v323 = vpop.f32.mrf.mxu0
    %324 = vmatprep.mubr.bf16.mxu0 0
    %325 = vmatmul.mubr.bf16.gmra.mxu0 %v259
    %v326 = vpop.f32.mrf.mxu0
    %v327 = vadd.f32 %v235, %v326
    %v328 = vpop.f32.mrf.mxu0
    %v329 = vpop.f32.mrf.mxu0
    %v330 = vadd.f32 %v236, %v329
    %v331 = vpop.f32.mrf.mxu0
    %332 = vmatprep.mubr.bf16.mxu0 0
    %333 = vmatmul.mubr.bf16.gmra.mxu0 %v262
    %v334 = vpop.f32.mrf.mxu0
    %v335 = vadd.f32 %v237, %v334
    %v336 = vpop.f32.mrf.mxu0
    %v337 = vpop.f32.mrf.mxu0
    %v338 = vadd.f32 %v238, %v337
    %v339 = vpop.f32.mrf.mxu0
    %340 = vdwg.mxu0
    %vm341 = vcmask 523264
    %v342 = vsel %vm341, %v311, -inf
    %343 = vmax.xlane.f32.xlu0 %v342
    %v344 = vpop.xlane.xlu0 %343
    %v345 = vsel %vm341, %v314, -inf
    %346 = vmax.xlane.f32.xlu0 %v345
    %v347 = vpop.xlane.xlu0 %346
    %v348 = vsel %vm341, %v319, -inf
    %349 = vmax.xlane.f32.xlu0 %v348
    %v350 = vpop.xlane.xlu0 %349
    %v351 = vsel %vm341, %v322, -inf
    %352 = vmax.xlane.f32.xlu0 %v351
    %v353 = vpop.xlane.xlu0 %352
    %v354 = vsel %vm341, %v327, -inf
    %355 = vmax.xlane.f32.xlu0 %v354
    %v356 = vpop.xlane.xlu0 %355
    %v357 = vsel %vm341, %v330, -inf
    %358 = vmax.xlane.f32.xlu0 %v357
    %v359 = vpop.xlane.xlu0 %358
    %v360 = vsel %vm341, %v335, -inf
    %361 = vmax.xlane.f32.xlu0 %v360
    %v362 = vpop.xlane.xlu0 %361
    %v363 = vsel %vm341, %v338, -inf
    %364 = vmax.xlane.f32.xlu0 %v363
    %v365 = vpop.xlane.xlu0 %364
    %v366 = vsub.f32 %v311, %v344
    %v367 = vsub.f32 %v314, %v347
    %v368 = vsub.f32 %v319, %v350
    %v369 = vsub.f32 %v322, %v353
    %v370 = vsub.f32 %v327, %v356
    %v371 = vsub.f32 %v330, %v359
    %v372 = vsub.f32 %v335, %v362
    %v373 = vsub.f32 %v338, %v365
    %v374 = vmul.f32 %v366, 1.442695
    %v375 = vpow.pop %v374
    %v376 = vmul.f32 %v367, 1.442695
    %v377 = vpow.pop %v376
    %v378 = vmul.f32 %v368, 1.442695
    %v379 = vpow.pop %v378
    %v380 = vmul.f32 %v369, 1.442695
    %v381 = vpow.pop %v380
    %v382 = vmul.f32 %v370, 1.442695
    %v383 = vpow.pop %v382
    %v384 = vmul.f32 %v371, 1.442695
    %v385 = vpow.pop %v384
    %v386 = vmul.f32 %v372, 1.442695
    %v387 = vpow.pop %v386
    %v388 = vmul.f32 %v373, 1.442695
    %v389 = vpow.pop %v388
    %v390 = vpack.c.bf16 %v377, %v375
    %v391 = vpack.c.bf16 %v381, %v379
    %v392 = vpack.c.bf16 %v385, %v383
    %v393 = vpack.c.bf16 %v389, %v387
    %398 = vrot.lane.b32.xlu0 %v227, 64
    %v399 = vpop.permute.xlu0 %398
    %400 = vrot.lane.b32.xlu0 %v228, 64
    %v401 = vpop.permute.xlu0 %400
    %402 = vrot.lane.b32.xlu0 %v229, 64
    %v403 = vpop.permute.xlu0 %402
    %404 = vrot.lane.b32.xlu0 %v230, 64
    %v405 = vpop.permute.xlu0 %404
    %v411 = vsel %vm341, %v390, 0
    %v414 = vsel %vm341, %v391, 0
    %v417 = vsel %vm341, %v392, 0
    %v420 = vsel %vm341, %v393, 0
    %422 = vmatprep.subr.bf16.mxu0 0
    %423 = vmatpush1.bf16.msra.mxu0 0
    %424 = vmatprep.subr.bf16.mxu0 0
    %425 = vmatpush1.bf16.msra.mxu0 0
    %426 = vmatprep.subr.bf16.mxu0 0
    %427 = vmatpush1.bf16.msra.mxu0 0
    %428 = vmatprep.subr.bf16.mxu0 0
    %429 = vmatpush1.bf16.msra.mxu0 0
    %430 = vmatprep.subr.bf16.mxu0 0
    %431 = vmatpush1.bf16.msra.mxu0 %v405
    %432 = vmatprep.subr.bf16.mxu0 0
    %433 = vmatpush1.bf16.msra.mxu0 %v403
    %434 = vmatprep.subr.bf16.mxu0 0
    %435 = vmatpush1.bf16.msra.mxu0 %v401
    %436 = vmatprep.subr.bf16.mxu0 0
    %437 = vmatpush1.bf16.msra.mxu0 %v399
    %438 = vmatprep.subr.bf16.mxu0 0
    %439 = vmatpush2.bf16.msra.mxu0 0
    %440 = vmatprep.subr.bf16.mxu0 0
    %441 = vmatpush2.bf16.msra.mxu0 0
    %442 = vmatprep.subr.bf16.mxu0 0
    %443 = vmatpush2.bf16.msra.mxu0 0
    %444 = vmatprep.subr.bf16.mxu0 0
    %445 = vmatpush2.bf16.msra.mxu0 0
    %446 = vmatprep.subr.bf16.mxu0 0
    %447 = vmatpush2.bf16.msra.mxu0 0
    %448 = vmatprep.subr.bf16.mxu0 0
    %449 = vmatpush2.bf16.msra.mxu0 0
    %450 = vmatprep.subr.bf16.mxu0 0
    %451 = vmatpush2.bf16.msra.mxu0 0
    %452 = vmatprep.subr.bf16.mxu0 0
    %453 = vmatpush2.bf16.msra.mxu0 0
    %454 = vmatprep.mubr.bf16.mxu0 0
    %455 = vmatmul.mubr.bf16.gmra.mxu0 %v411
    %v456 = vpop.f32.mrf.mxu0
    %v457 = vadd.f32 0.0, %v456
    %v458 = vpop.f32.mrf.mxu0
    %v459 = vpop.f32.mrf.mxu0
    %v460 = vadd.f32 0.0, %v459
    %v461 = vpop.f32.mrf.mxu0
    %462 = vmatprep.mubr.bf16.mxu0 0
    %463 = vmatmul.mubr.bf16.gmra.mxu0 %v414
    %v464 = vpop.f32.mrf.mxu0
    %v465 = vadd.f32 0.0, %v464
    %v466 = vpop.f32.mrf.mxu0
    %v467 = vpop.f32.mrf.mxu0
    %v468 = vadd.f32 0.0, %v467
    %v469 = vpop.f32.mrf.mxu0
    %470 = vmatprep.mubr.bf16.mxu0 0
    %471 = vmatmul.mubr.bf16.gmra.mxu0 %v417
    %v472 = vpop.f32.mrf.mxu0
    %v473 = vadd.f32 0.0, %v472
    %v474 = vpop.f32.mrf.mxu0
    %v475 = vpop.f32.mrf.mxu0
    %v476 = vadd.f32 0.0, %v475
    %v477 = vpop.f32.mrf.mxu0
    %478 = vmatprep.mubr.bf16.mxu0 0
    %479 = vmatmul.mubr.bf16.gmra.mxu0 %v420
    %v480 = vpop.f32.mrf.mxu0
    %v481 = vadd.f32 0.0, %v480
    %v482 = vpop.f32.mrf.mxu0
    %v483 = vpop.f32.mrf.mxu0
    %v484 = vadd.f32 0.0, %v483
    %v485 = vpop.f32.mrf.mxu0
    %486 = vdwg.mxu0
    %v487 = vsel %vm341, %v375, 0.0
    %488 = vadd.xlane.f32.xlu0 %v487
    %v489 = vpop.xlane.xlu0 %488
    %v490 = vsel %vm341, %v377, 0.0
    %491 = vadd.xlane.f32.xlu0 %v490
    %v492 = vpop.xlane.xlu0 %491
    %v493 = vsel %vm341, %v379, 0.0
    %494 = vadd.xlane.f32.xlu0 %v493
    %v495 = vpop.xlane.xlu0 %494
    %v496 = vsel %vm341, %v381, 0.0
    %497 = vadd.xlane.f32.xlu0 %v496
    %v498 = vpop.xlane.xlu0 %497
    %v499 = vsel %vm341, %v383, 0.0
    %500 = vadd.xlane.f32.xlu0 %v499
    %v501 = vpop.xlane.xlu0 %500
    %v502 = vsel %vm341, %v385, 0.0
    %503 = vadd.xlane.f32.xlu0 %v502
    %v504 = vpop.xlane.xlu0 %503
    %v505 = vsel %vm341, %v387, 0.0
    %506 = vadd.xlane.f32.xlu0 %v505
    %v507 = vpop.xlane.xlu0 %506
    %v508 = vsel %vm341, %v389, 0.0
    %509 = vadd.xlane.f32.xlu0 %v508
    %v510 = vpop.xlane.xlu0 %509
    %v511 = vrcp.pop %v489
    %v512 = vrcp.pop %v492
    %v513 = vrcp.pop %v495
    %v514 = vrcp.pop %v498
    %v515 = vrcp.pop %v501
    %v516 = vrcp.pop %v504
    %v517 = vrcp.pop %v507
    %v518 = vrcp.pop %v510
    %v519 = vmul.f32 %v457, %v511
    %v520 = vmul.f32 %v460, %v512
    %v521 = vmul.f32 %v465, %v513
    %v522 = vmul.f32 %v468, %v514
    %v523 = vmul.f32 %v473, %v515
    %v524 = vmul.f32 %v476, %v516
    %v525 = vmul.f32 %v481, %v517
    %v526 = vmul.f32 %v484, %v518
    %529 = vrot.lane.b32.xlu0 %v521, 8
    %v530 = vpop.permute.xlu0 %529
    %531 = vrot.lane.b32.xlu0 %v522, 8
    %v532 = vpop.permute.xlu0 %531
    %537 = vrot.lane.b32.xlu0 %v523, 16
    %v538 = vpop.permute.xlu0 %537
    %539 = vrot.lane.b32.xlu0 %v524, 16
    %v540 = vpop.permute.xlu0 %539
    %545 = vrot.lane.b32.xlu0 %v525, 24
    %v546 = vpop.permute.xlu0 %545
    %547 = vrot.lane.b32.xlu0 %v526, 24
    %v548 = vpop.permute.xlu0 %547
    %v551 = vsel %vm251, %v519, %v530
    %v552 = vsel %vm251, %v520, %v532
    %vm553 = vcmask 130048
    %v554 = vsel %vm553, %v551, %v538
    %v555 = vsel %vm553, %v552, %v540
    %vm556 = vcmask 195584
    %v557 = vsel %vm556, %v554, %v546
    %v558 = vsel %vm556, %v555, %v548
    %v559 = vpack.c.bf16 %v558, %v557
    %v560 = vld [vmem:[#allocation10] sm:$0xf]
    %v561 = vld [vmem:[#allocation10 + $0x4] sm:$0xf]
    %v562 = vld [vmem:[#allocation10 + $0x8] sm:$0xf]
    %v563 = vld [vmem:[#allocation10 + $0xc] sm:$0xf]
    %v564 = vld [vmem:[%s6] sm:$0x1]
    %v565 = vlaneseq
    %v566 = vshrl.u32 %v565, 7
    %v567 = vsub.s32 0, %v566
    %v568 = vrot.slane %v564, %v567
    %v573 = vunpack.c.l.b16 %v560
    %v574 = vunpack.c.l.b16 %v561
    %v575 = vunpack.c.l.b16 %v562
    %v576 = vunpack.c.l.b16 %v563
    %v577 = vpack.c.b16 %v574, %v573
    %v578 = vpack.c.b16 %v576, %v575
    %v582 = vsel %vm127, %v559, 0
    %584 = vmatprep.subr.bf16.mxu0 0
    %585 = vmatpush1.bf16.msra.mxu0 0
    %586 = vmatprep.subr.bf16.mxu0 0
    %587 = vmatpush1.bf16.msra.mxu0 0
    %588 = vmatprep.subr.bf16.mxu0 0
    %589 = vmatpush1.bf16.msra.mxu0 0
    %590 = vmatprep.subr.bf16.mxu0 0
    %591 = vmatpush1.bf16.msra.mxu0 0
    %592 = vmatprep.subr.bf16.mxu0 0
    %593 = vmatpush1.bf16.msra.mxu0 0
    %594 = vmatprep.subr.bf16.mxu0 0
    %595 = vmatpush1.bf16.msra.mxu0 0
    %596 = vmatprep.subr.bf16.mxu0 0
    %597 = vmatpush1.bf16.msra.mxu0 %v578
    %598 = vmatprep.subr.bf16.mxu0 0
    %599 = vmatpush1.bf16.msra.mxu0 %v577
    %600 = vmatprep.subr.bf16.mxu0 0
    %601 = vmatpush2.bf16.msra.mxu0 0
    %602 = vmatprep.subr.bf16.mxu0 0
    %603 = vmatpush2.bf16.msra.mxu0 0
    %604 = vmatprep.subr.bf16.mxu0 0
    %605 = vmatpush2.bf16.msra.mxu0 0
    %606 = vmatprep.subr.bf16.mxu0 0
    %607 = vmatpush2.bf16.msra.mxu0 0
    %608 = vmatprep.subr.bf16.mxu0 0
    %609 = vmatpush2.bf16.msra.mxu0 0
    %610 = vmatprep.subr.bf16.mxu0 0
    %611 = vmatpush2.bf16.msra.mxu0 0
    %612 = vmatprep.subr.bf16.mxu0 0
    %613 = vmatpush2.bf16.msra.mxu0 0
    %614 = vmatprep.subr.bf16.mxu0 0
    %615 = vmatpush2.bf16.msra.mxu0 0
    %616 = vmatprep.mubr.bf16.mxu0 0
    %617 = vmatmul.mubr.bf16.gmra.mxu0 %v582
    %v618 = vpop.f32.mrf.mxu0
    %v619 = vadd.f32 %v568, %v618
    %v620 = vpop.f32.mrf.mxu0
    %v621 = vpop.f32.mrf.mxu0
    %v622 = vadd.f32 %v568, %v621
    %v623 = vpop.f32.mrf.mxu0
    %624 = vdwg.mxu0
    %v625 = vadd.f32 %v96, %v619
    %v626 = vadd.f32 %v97, %v622
    %v627 = vsel %vm127, %v625, 0.0
    %628 = vadd.xlane.f32.xlu0 %v627
    %v629 = vpop.xlane.xlu0 %628
    %v630 = vsel %vm127, %v626, 0.0
    %631 = vadd.xlane.f32.xlu0 %v630
    %v632 = vpop.xlane.xlu0 %631
    %v633 = vrcp.pop 32.0
    %v634 = vmul.f32 %v629, %v633
    %v635 = vmul.f32 %v632, %v633
    %v636 = vmul.f32 %v625, %v625
    %v637 = vmul.f32 %v626, %v626
    %v638 = vsel %vm127, %v636, 0.0
    %639 = vadd.xlane.f32.xlu0 %v638
    %v640 = vpop.xlane.xlu0 %639
    %v641 = vsel %vm127, %v637, 0.0
    %642 = vadd.xlane.f32.xlu0 %v641
    %v643 = vpop.xlane.xlu0 %642
    %v644 = vmul.f32 %v640, %v633
    %v645 = vmul.f32 %v643, %v633
    %v646 = vmul.f32 %v634, %v634
    %v647 = vmul.f32 %v635, %v635
    %v648 = vsub.f32 %v644, %v646
    %v649 = vsub.f32 %v645, %v647
    %v650 = vsub.f32 %v625, %v634
    %v651 = vsub.f32 %v626, %v635
    %v652 = vadd.f32 %v648, 1e-05
    %v653 = vadd.f32 %v649, 1e-05
    %v654 = vrsqrt.pop %v652
    %v655 = vrsqrt.pop %v653
    %v656 = vmul.f32 %v650, %v654
    %v657 = vmul.f32 %v651, %v655
    %v658 = vld [vmem:[%s6 + $0x1] sm:$0x1]
    %v659 = vlaneseq
    %v660 = vshrl.u32 %v659, 7
    %v661 = vsub.s32 0, %v660
    %v662 = vrot.slane %v658, %v661
    %v663 = vmul.f32 %v656, %v662
    %v664 = vmul.f32 %v657, %v662
    %v665 = vld [vmem:[%s6 + $0x2] sm:$0x1]
    %v666 = vlaneseq
    %v667 = vshrl.u32 %v666, 7
    %v668 = vsub.s32 0, %v667
    %v669 = vrot.slane %v665, %v668
    %v670 = vadd.f32 %v663, %v669
    %v671 = vadd.f32 %v664, %v669
    %672 = vst.msk [vmem:[#allocation11] sm:$0xff] %vm127, %v670
    %673 = vst.msk [vmem:[#allocation11 + $0x8] sm:$0xff] %vm127, %v671
    // Predicated region
    $region50: #{encoder_layer_thin.1} parent=1 // pred_check
      _
    $region51: #{encoder_layer_thin.1} parent=1 // pred_check_branch
      %675 = sbr.rel (0) target = $region53
    $region52: #{encoder_layer_thin.1} parent=1 // pred_region
      %s677 = ssub.s32 256, 256
      %678 = vsyncadd [#allocation4], %s677
      %s679 = sshll.u32 [#allocation11], 4
      %s680 = int_to_ptr.vmem [resolvable:$true] %s679
      %685 = dma.vmem_to_hbm [thread:$0]  %s680, 256, %s7, [#allocation4], 128, 128, 8
    $region53: #{encoder_layer_thin.1} parent=1 // pred_fallthru
      _
    // Predicated region
    $region54: #{encoder_layer_thin.1} parent=1 // pred_check
      _
    $region55: #{encoder_layer_thin.1} parent=1 // pred_check_branch
      %687 = sbr.rel (0) target = $region57
    $region56: #{encoder_layer_thin.1} parent=1 // pred_region
      %688 = dma.done [#allocation4], 256
    $region57: #{encoder_layer_thin.1} parent=1 // pred_fallthru
      _
    %689 = vsyncpa [#allocation3], 1
    %690 = vsyncpa [#allocation6], 1
    %691 = vsyncpa [#allocation9], 1
    %692 = vsyncpa [#allocation4], 1

</llo_original>
